<compile_context>
chip_gen: v7x
topology: tpu7x:2x2x1
jax: 0.10.0
libtpu: 0.0.40
codegen_flags: <defaults>
</compile_context>

<pallas_src>
import functools

import jax
import jax.numpy as jnp
from jax.experimental import pallas as pl
from jax.experimental.pallas import tpu as pltpu


def _round_up(x, m):
    return (x + m - 1) // m * m


def _mlp_kernel(x_ref, w1_ref, b1_ref, w2_ref, b2_ref, w3_ref, b3_ref, o_ref):
    # x arrives f32 from HBM; cast to the MXU dtype (bf16) in-kernel so the
    # wrapper never materializes a padded/cast copy of the whole input.
    x = x_ref[...].astype(w1_ref.dtype)
    # fc1 + ReLU (bf16 operands, f32 MXU accumulation, f32 bias add / ReLU)
    h1 = jnp.dot(x, w1_ref[...], preferred_element_type=jnp.float32)
    h1 = jnp.maximum(h1 + b1_ref[...], 0.0).astype(w2_ref.dtype)
    # fc2 + ReLU
    h2 = jnp.dot(h1, w2_ref[...], preferred_element_type=jnp.float32)
    h2 = jnp.maximum(h2 + b2_ref[...], 0.0).astype(w3_ref.dtype)
    # fc (final logits, no activation)
    out = jnp.dot(h2, w3_ref[...], preferred_element_type=jnp.float32)
    o_ref[...] = (out + b3_ref[...]).astype(o_ref.dtype)


def prepare_params(params, act_dtype=jnp.bfloat16):
    """One-time weight prep (call ONCE, outside the inference loop).

    PyTorch layout (w: [out, in], b: [out]) -> kernel layout:
      wXt: [in_pad, out_pad] in `act_dtype`, zero-padded to multiples of 128.
      bX : [1, out_pad] float32, zero-padded.
    """
    def pad2(a, rows, cols):
        return jnp.zeros((rows, cols), a.dtype).at[: a.shape[0], : a.shape[1]].set(a)

    w1, b1 = params["w1"], params["b1"]
    w2, b2 = params["w2"], params["b2"]
    w3, b3 = params["w3"], params["b3"]
    f_dim, fc1, fc2, k = w1.shape[1], w1.shape[0], w2.shape[0], w3.shape[0]
    f_p, fc1_p, fc2_p, k_p = (_round_up(d, 128) for d in (f_dim, fc1, fc2, k))

    return {
        "w1t": pad2(w1.T.astype(act_dtype), f_p, fc1_p),
        "b1": jnp.zeros((1, fc1_p), jnp.float32).at[0, :fc1].set(b1.astype(jnp.float32)),
        "w2t": pad2(w2.T.astype(act_dtype), fc1_p, fc2_p),
        "b2": jnp.zeros((1, fc2_p), jnp.float32).at[0, :fc2].set(b2.astype(jnp.float32)),
        "w3t": pad2(w3.T.astype(act_dtype), fc2_p, k_p),
        "b3": jnp.zeros((1, k_p), jnp.float32).at[0, :k].set(b3.astype(jnp.float32)),
        "f_dim": f_dim,   # python ints (metadata); stripped before the jitted call
        "k": k,
    }


def _default_batch_tile():
    """Generation-aware batch tile.

    Need >= ~1 MiB streamed per grid step to hide the ~0.35 us/step pipeline
    overhead; v7x's ~3.2 TB/s HBM wants roughly 2x the v5e/v6e tile.
    """
    try:
        info = pltpu.get_tpu_info()
        if "7" in str(getattr(info, "chip_version", "")):
            return 2048
    except Exception:
        pass
    return 1024


@functools.partial(jax.jit, static_argnames=("k", "tn"))
def _forward_jit(x, weights, *, k, tn):
    n, f_dim = x.shape
    w1t, b1 = weights["w1t"], weights["b1"]
    w2t, b2 = weights["w2t"], weights["b2"]
    w3t, b3 = weights["w3t"], weights["b3"]

    f_p, fc1_p = w1t.shape
    fc2_p = w2t.shape[1]
    k_p = w3t.shape[1]

    # Batch tile: multiple of 16 (covers f32 (8,128) and bf16 (16,128) packing).
    sub = 16
    if tn is None:
        tn = min(_default_batch_tile(), _round_up(n, sub))
        # Auto-shrink so double-buffered x/out tiles leave scoped-VMEM headroom
        # for the resident weights + f32 intermediates (v5e default is 16 MiB).
        per_row_bytes = (f_p + k_p) * 4
        while tn > sub and 2 * tn * per_row_bytes > 24 * 1024 * 1024:
            tn //= 2
    tn = max(sub, _round_up(tn, sub))
    n_p = _round_up(n, tn)

    # Pad only what is strictly necessary (batch remainder / misaligned f_dim).
    # x stays f32: the bf16 cast happens inside the kernel, not in the wrapper.
    pad_n, pad_f = n_p - n, f_p - f_dim
    xp = jnp.pad(x, ((0, pad_n), (0, pad_f))) if (pad_n or pad_f) else x

    resident = lambda i: (0, 0)
    grid = (n_p // tn,)

    weight_bytes = sum(a.size * a.dtype.itemsize for a in (w1t, b1, w2t, b2, w3t, b3))
    bytes_accessed = xp.size * xp.dtype.itemsize + weight_bytes + n_p * k_p * 4
    flops = 2 * n_p * (f_p * fc1_p + fc1_p * fc2_p + fc2_p * k_p)

    compiler_kwargs = dict(dimension_semantics=("parallel",))
    vmem_needed = (2 * tn * f_p * 4            # double-buffered f32 x tiles
                   + 2 * tn * k_p * 4          # double-buffered f32 out tiles
                   + weight_bytes              # resident weights/biases
                   + 2 * tn * max(fc1_p, fc2_p) * 4)   # f32 intermediates
    if vmem_needed > 16 * 1024 * 1024:  # exceeds v5e's default scoped VMEM
        compiler_kwargs["vmem_limit_bytes"] = int(
            min(vmem_needed * 5 // 4, 60 * 1024 * 1024))

    out = pl.pallas_call(
        _mlp_kernel,
        out_shape=jax.ShapeDtypeStruct((n_p, k_p), jnp.float32),
        grid=grid,
        in_specs=[
            pl.BlockSpec((tn, f_p), lambda i: (i, 0)),      # x tile (streamed, f32)
            pl.BlockSpec((f_p, fc1_p), resident),           # w1 (VMEM-resident)
            pl.BlockSpec((1, fc1_p), resident),             # b1
            pl.BlockSpec((fc1_p, fc2_p), resident),         # w2
            pl.BlockSpec((1, fc2_p), resident),             # b2
            pl.BlockSpec((fc2_p, k_p), resident),           # w3
            pl.BlockSpec((1, k_p), resident),               # b3
        ],
        out_specs=pl.BlockSpec((tn, k_p), lambda i: (i, 0)),
        compiler_params=pltpu.CompilerParams(**compiler_kwargs),
        cost_estimate=pl.CostEstimate(
            flops=flops, transcendentals=0, bytes_accessed=bytes_accessed),
    )(xp, w1t, b1, w2t, b2, w3t, b3)

    # n and k are static Python ints here (k via static_argnames) -> static slice.
    return out[:n, :k]


def simple_classifier_forward(x, prepped, *, tn=None):
    """Pallas forward pass equivalent to SimpleClassifier.forward.

    x: [N, f_dim] float32.  prepped: output of prepare_params().
    Returns [N, k] float32 logits.
    """
    weights = {name: v for name, v in prepped.items() if name not in ("k", "f_dim")}
    return _forward_jit(x, weights, k=int(prepped["k"]), tn=tn)


# ---------------------------------------------------------------------------
# Param init matching the PyTorch module (xavier_uniform weights, default bias).
# ---------------------------------------------------------------------------
def _xavier_uniform(key, out_dim, in_dim, gain=1.0, dtype=jnp.float32):
    bound = gain * (6.0 / (in_dim + out_dim)) ** 0.5
    return jax.random.uniform(key, (out_dim, in_dim), dtype, -bound, bound)


def _bias_uniform(key, out_dim, in_dim, dtype=jnp.float32):
    bound = 1.0 / (in_dim ** 0.5)
    return jax.random.uniform(key, (out_dim,), dtype, -bound, bound)


def init_params(key, f_dim, fc1_dim, fc2_dim, k):
    ks = jax.random.split(key, 6)
    return {
        "w1": _xavier_uniform(ks[0], fc1_dim, f_dim),
        "b1": _bias_uniform(ks[1], fc1_dim, f_dim),
        "w2": _xavier_uniform(ks[2], fc2_dim, fc1_dim),
        "b2": _bias_uniform(ks[3], fc2_dim, fc1_dim),
        "w3": _xavier_uniform(ks[4], k, fc2_dim),
        "b3": _bias_uniform(ks[5], k, fc2_dim),
    }


if __name__ == "__main__":
    # Small shapes consistent with the module (scaled-down f_dim / fc1; fc2 and
    # k kept at their lane-misaligned real values to exercise the padding path).
    N, F_DIM, FC1, FC2, K = 8, 256, 128, 100, 9

    key = jax.random.PRNGKey(0)
    k_x, k_p = jax.random.split(key)
    x = jax.random.normal(k_x, (N, F_DIM), jnp.float32)
    params = init_params(k_p, F_DIM, FC1, FC2, K)

    prepped = prepare_params(params)           # one-time prep (transpose/pad/cast)
    out = simple_classifier_forward(x, prepped)
    out = jax.block_until_ready(out)

    # Reference mirroring the kernel's precision: bf16 operands, f32 accumulate.
    def cast(a):
        return a.astype(jnp.bfloat16).astype(jnp.float32)

    h = jnp.maximum(cast(x) @ cast(params["w1"]).T + params["b1"], 0.0)
    h = jnp.maximum(cast(h) @ cast(params["w2"]).T + params["b2"], 0.0)
    ref_bf16 = cast(h) @ cast(params["w3"]).T + params["b3"]

    # Pure-f32 reference (loose tolerance; checks overall semantics).
    hf = jnp.maximum(x @ params["w1"].T + params["b1"], 0.0)
    hf = jnp.maximum(hf @ params["w2"].T + params["b2"], 0.0)
    ref_f32 = hf @ params["w3"].T + params["b3"]

    assert out.shape == (N, K)
    assert jnp.allclose(out, ref_bf16, atol=2e-3, rtol=2e-3)
    assert jnp.allclose(out, ref_f32, atol=5e-2, rtol=5e-2)

    print("KERNEL_OK")
</pallas_src>

<mosaic_0001>
module attributes {stable_mosaic.version = 11 : i64} {
  func.func @_mlp_kernel(%arg0: i32, %arg1: memref<16x256xf32, #tpu.memory_space<vmem>>, %arg2: memref<256x128xbf16, #tpu.memory_space<vmem>>, %arg3: memref<1x128xf32, #tpu.memory_space<vmem>>, %arg4: memref<128x128xbf16, #tpu.memory_space<vmem>>, %arg5: memref<1x128xf32, #tpu.memory_space<vmem>>, %arg6: memref<128x128xbf16, #tpu.memory_space<vmem>>, %arg7: memref<1x128xf32, #tpu.memory_space<vmem>>, %arg8: memref<16x128xf32, #tpu.memory_space<vmem>>) attributes {dimension_semantics = [#tpu.dimension_semantics<parallel>], iteration_bounds = array<i64: 1>, scalar_prefetch = 0 : i64, scratch_operands = 0 : i64, tpu.core_type = #tpu.core_type<tc>, window_params = [{transform_indices = @transform_0, window_bounds = array<i64: 16, 256>}, {pipeline_mode = #tpu.pipeline_mode<synchronous>, transform_indices = @transform_1, window_bounds = array<i64: 256, 128>}, {pipeline_mode = #tpu.pipeline_mode<synchronous>, transform_indices = @transform_2, window_bounds = array<i64: 1, 128>}, {pipeline_mode = #tpu.pipeline_mode<synchronous>, transform_indices = @transform_3, window_bounds = array<i64: 128, 128>}, {pipeline_mode = #tpu.pipeline_mode<synchronous>, transform_indices = @transform_4, window_bounds = array<i64: 1, 128>}, {pipeline_mode = #tpu.pipeline_mode<synchronous>, transform_indices = @transform_5, window_bounds = array<i64: 128, 128>}, {pipeline_mode = #tpu.pipeline_mode<synchronous>, transform_indices = @transform_6, window_bounds = array<i64: 1, 128>}, {transform_indices = @transform_7, window_bounds = array<i64: 16, 128>}]} {
    %c0 = arith.constant 0 : index
    %c0_0 = arith.constant 0 : index
    %0 = vector.load %arg1[%c0, %c0_0] : memref<16x256xf32, #tpu.memory_space<vmem>>, vector<16x256xf32>
    %1 = arith.truncf %0 : vector<16x256xf32> to vector<16x256xbf16>
    %c0_1 = arith.constant 0 : index
    %c0_2 = arith.constant 0 : index
    %2 = vector.load %arg2[%c0_1, %c0_2] : memref<256x128xbf16, #tpu.memory_space<vmem>>, vector<256x128xbf16>
    %cst = arith.constant dense<0.000000e+00> : vector<16x128xf32>
    %3 = tpu.matmul %1, %2, %cst {dimension_numbers = #tpu.dot_dimension_numbers<[1], [0], [0], [1], [0, 0, 1, 1], [], []>} : vector<16x256xbf16>, vector<256x128xbf16>, vector<16x128xf32> -> vector<16x128xf32>
    %c0_3 = arith.constant 0 : index
    %c0_4 = arith.constant 0 : index
    %4 = vector.load %arg3[%c0_3, %c0_4] : memref<1x128xf32, #tpu.memory_space<vmem>>, vector<1x128xf32>
    %5 = vector.broadcast %4 : vector<1x128xf32> to vector<16x128xf32>
    %6 = arith.addf %3, %5 : vector<16x128xf32>
    %cst_5 = arith.constant 0.000000e+00 : f32
    %7 = vector.broadcast %cst_5 : f32 to vector<16x128xf32>
    %8 = arith.maximumf %6, %7 : vector<16x128xf32>
    %9 = arith.truncf %8 : vector<16x128xf32> to vector<16x128xbf16>
    %c0_6 = arith.constant 0 : index
    %c0_7 = arith.constant 0 : index
    %10 = vector.load %arg4[%c0_6, %c0_7] : memref<128x128xbf16, #tpu.memory_space<vmem>>, vector<128x128xbf16>
    %cst_8 = arith.constant dense<0.000000e+00> : vector<16x128xf32>
    %11 = tpu.matmul %9, %10, %cst_8 {dimension_numbers = #tpu.dot_dimension_numbers<[1], [0], [0], [1], [0, 0, 1, 1], [], []>} : vector<16x128xbf16>, vector<128x128xbf16>, vector<16x128xf32> -> vector<16x128xf32>
    %c0_9 = arith.constant 0 : index
    %c0_10 = arith.constant 0 : index
    %12 = vector.load %arg5[%c0_9, %c0_10] : memref<1x128xf32, #tpu.memory_space<vmem>>, vector<1x128xf32>
    %13 = vector.broadcast %12 : vector<1x128xf32> to vector<16x128xf32>
    %14 = arith.addf %11, %13 : vector<16x128xf32>
    %cst_11 = arith.constant 0.000000e+00 : f32
    %15 = vector.broadcast %cst_11 : f32 to vector<16x128xf32>
    %16 = arith.maximumf %14, %15 : vector<16x128xf32>
    %17 = arith.truncf %16 : vector<16x128xf32> to vector<16x128xbf16>
    %c0_12 = arith.constant 0 : index
    %c0_13 = arith.constant 0 : index
    %18 = vector.load %arg6[%c0_12, %c0_13] : memref<128x128xbf16, #tpu.memory_space<vmem>>, vector<128x128xbf16>
    %cst_14 = arith.constant dense<0.000000e+00> : vector<16x128xf32>
    %19 = tpu.matmul %17, %18, %cst_14 {dimension_numbers = #tpu.dot_dimension_numbers<[1], [0], [0], [1], [0, 0, 1, 1], [], []>} : vector<16x128xbf16>, vector<128x128xbf16>, vector<16x128xf32> -> vector<16x128xf32>
    %c0_15 = arith.constant 0 : index
    %c0_16 = arith.constant 0 : index
    %20 = vector.load %arg7[%c0_15, %c0_16] : memref<1x128xf32, #tpu.memory_space<vmem>>, vector<1x128xf32>
    %21 = vector.broadcast %20 : vector<1x128xf32> to vector<16x128xf32>
    %22 = arith.addf %19, %21 : vector<16x128xf32>
    %c0_17 = arith.constant 0 : index
    %c0_18 = arith.constant 0 : index
    %23 = vector.load %arg8[%c0_17, %c0_18] : memref<16x128xf32, #tpu.memory_space<vmem>>, vector<16x128xf32>
    tpu.vector_store %arg8[%c0_17, %c0_18], %22 {strides = array<i32>} : memref<16x128xf32, #tpu.memory_space<vmem>>, vector<16x128xf32>,
    return
  }
  func.func @transform_0(%arg0: i32) -> (i32, i32) {
    %c0_i32 = arith.constant 0 : i32
    %c0_i32_0 = arith.constant 0 : i32
    return %arg0, %c0_i32 : i32, i32
  }
  func.func @transform_1(%arg0: i32) -> (i32, i32) {
    %c0_i32 = arith.constant 0 : i32
    %c0_i32_0 = arith.constant 0 : i32
    %c0_i32_1 = arith.constant 0 : i32
    return %c0_i32, %c0_i32_0 : i32, i32
  }
  func.func @transform_2(%arg0: i32) -> (i32, i32) {
    %c0_i32 = arith.constant 0 : i32
    %c0_i32_0 = arith.constant 0 : i32
    %c0_i32_1 = arith.constant 0 : i32
    return %c0_i32, %c0_i32_0 : i32, i32
  }
  func.func @transform_3(%arg0: i32) -> (i32, i32) {
    %c0_i32 = arith.constant 0 : i32
    %c0_i32_0 = arith.constant 0 : i32
    %c0_i32_1 = arith.constant 0 : i32
    return %c0_i32, %c0_i32_0 : i32, i32
  }
  func.func @transform_4(%arg0: i32) -> (i32, i32) {
    %c0_i32 = arith.constant 0 : i32
    %c0_i32_0 = arith.constant 0 : i32
    %c0_i32_1 = arith.constant 0 : i32
    return %c0_i32, %c0_i32_0 : i32, i32
  }
  func.func @transform_5(%arg0: i32) -> (i32, i32) {
    %c0_i32 = arith.constant 0 : i32
    %c0_i32_0 = arith.constant 0 : i32
    %c0_i32_1 = arith.constant 0 : i32
    return %c0_i32, %c0_i32_0 : i32, i32
  }
  func.func @transform_6(%arg0: i32) -> (i32, i32) {
    %c0_i32 = arith.constant 0 : i32
    %c0_i32_0 = arith.constant 0 : i32
    %c0_i32_1 = arith.constant 0 : i32
    return %c0_i32, %c0_i32_0 : i32, i32
  }
  func.func @transform_7(%arg0: i32) -> (i32, i32) {
    %c0_i32 = arith.constant 0 : i32
    %c0_i32_0 = arith.constant 0 : i32
    return %arg0, %c0_i32 : i32, i32
  }
}

</mosaic_0001>

<llo_original>
// kernel: _forward_jit.1
$region0: #{_forward_jit.1}
  #allocation0 [shape = 'u32[]', space=smem, size = 0x4, offset = 0x4, fixed_abs, tag = 'smem constant byte address 0x4 - core index']
  #allocation1 [shape = 'u32[144,128]{1,0:T(1,128)}', space=vmem, size = 0x12000, scoped, tag = 'internal scratch']
  %s0 = inlined_call_operand.vmem [shape: f32[16,256], index: 0, kind: input, shape index: {}]
  %s1 = inlined_call_operand.hbm [shape: bf16[256,128], index: 1, kind: input, shape index: {}]
  %s2 = inlined_call_operand.vmem [shape: f32[1,128], index: 2, kind: input, shape index: {}]
  %s3 = inlined_call_operand.vmem [shape: bf16[128,128], index: 3, kind: input, shape index: {}]
  %s4 = inlined_call_operand.vmem [shape: f32[1,128], index: 4, kind: input, shape index: {}]
  %s5 = inlined_call_operand.hbm [shape: bf16[128,128], index: 5, kind: input, shape index: {}]
  %s6 = inlined_call_operand.vmem [shape: f32[1,128], index: 6, kind: input, shape index: {}]
  %s7 = inlined_call_operand.vmem [shape: f32[16,128], index: 7, kind: output, shape index: {}]
  %s8 = sld [smem:[#allocation0]]
  $region46: #{_forward_jit.1} parent=0
    _
  %s10 = ssub.s32 1, %s8
  %s11 = scalar_select 0, %s10, %s8
  $region1: #{_forward_jit.1} parent=0
    #allocation2 [shape = 'u8[65536]{0}', space=vmem, size = 0x10000, scoped, tag = 'input window, operand 1, single buffered']
    #allocation3 [shape = 's32[1]{0}', space=sflag, size = 0x4, scoped, tag = 'scoped memory for _forward_jit.1']
    #allocation4 [shape = 'u8[32768]{0}', space=vmem, size = 0x8000, scoped, tag = 'input window, operand 5, single buffered']
    #allocation5 [shape = 's32[1]{0}', space=sflag, size = 0x4, scoped, tag = 'scoped memory for _forward_jit.1']
    %12 = vsyncpa [#allocation3], 0
    %13 = vsyncpa [#allocation5], 0
    // Predicated region
    $region2: #{_forward_jit.1} parent=1 // pred_check
      _
    $region3: #{_forward_jit.1} parent=1 // pred_check_branch
      %15 = sbr.rel (0) target = $region5
    $region4: #{_forward_jit.1} parent=1 // pred_region
      _
    $region5: #{_forward_jit.1} parent=1 // pred_fallthru
      _
    // Predicated region
    $region6: #{_forward_jit.1} parent=1 // pred_check
      _
    $region7: #{_forward_jit.1} parent=1 // pred_check_branch
      %17 = sbr.rel (0) target = $region9
    $region8: #{_forward_jit.1} parent=1 // pred_region
      %s19 = ssub.s32 2048, 2048
      %20 = vsyncadd [#allocation3], %s19
      %s21 = sshll.u32 [#allocation2], 4
      %s22 = int_to_ptr.vmem [resolvable:$true] %s21
      %27 = dma.hbm_to_vmem [thread:$0]  %s1, 2048, %s22, [#allocation3], 64, 64, 4
    $region9: #{_forward_jit.1} parent=1 // pred_fallthru
      _
    // Predicated region
    $region10: #{_forward_jit.1} parent=1 // pred_check
      _
    $region11: #{_forward_jit.1} parent=1 // pred_check_branch
      %29 = sbr.rel (0) target = $region13
    $region12: #{_forward_jit.1} parent=1 // pred_region
      _
    $region13: #{_forward_jit.1} parent=1 // pred_fallthru
      _
    // Predicated region
    $region14: #{_forward_jit.1} parent=1 // pred_check
      _
    $region15: #{_forward_jit.1} parent=1 // pred_check_branch
      %31 = sbr.rel (0) target = $region17
    $region16: #{_forward_jit.1} parent=1 // pred_region
      _
    $region17: #{_forward_jit.1} parent=1 // pred_fallthru
      _
    // Predicated region
    $region18: #{_forward_jit.1} parent=1 // pred_check
      _
    $region19: #{_forward_jit.1} parent=1 // pred_check_branch
      %33 = sbr.rel (0) target = $region21
    $region20: #{_forward_jit.1} parent=1 // pred_region
      _
    $region21: #{_forward_jit.1} parent=1 // pred_fallthru
      _
    // Predicated region
    $region22: #{_forward_jit.1} parent=1 // pred_check
      _
    $region23: #{_forward_jit.1} parent=1 // pred_check_branch
      %35 = sbr.rel (0) target = $region25
    $region24: #{_forward_jit.1} parent=1 // pred_region
      %s37 = ssub.s32 1024, 1024
      %38 = vsyncadd [#allocation5], %s37
      %s39 = sshll.u32 [#allocation4], 4
      %s40 = int_to_ptr.vmem [resolvable:$true] %s39
      %45 = dma.hbm_to_vmem [thread:$0]  %s5, 1024, %s40, [#allocation5], 64, 64, 4
    $region25: #{_forward_jit.1} parent=1 // pred_fallthru
      _
    // Predicated region
    $region26: #{_forward_jit.1} parent=1 // pred_check
      _
    $region27: #{_forward_jit.1} parent=1 // pred_check_branch
      %47 = sbr.rel (0) target = $region29
    $region28: #{_forward_jit.1} parent=1 // pred_region
      _
    $region29: #{_forward_jit.1} parent=1 // pred_fallthru
      _
    // Predicated region
    $region30: #{_forward_jit.1} parent=1 // pred_check
      _
    $region31: #{_forward_jit.1} parent=1 // pred_check_branch
      %49 = sbr.rel (0) target = $region33
    $region32: #{_forward_jit.1} parent=1 // pred_region
      %50 = dma.done [#allocation3], 2048
    $region33: #{_forward_jit.1} parent=1 // pred_fallthru
      _
    // Predicated region
    $region34: #{_forward_jit.1} parent=1 // pred_check
      _
    $region35: #{_forward_jit.1} parent=1 // pred_check_branch
      %52 = sbr.rel (0) target = $region37
    $region36: #{_forward_jit.1} parent=1 // pred_region
      %53 = dma.done [#allocation5], 1024
    $region37: #{_forward_jit.1} parent=1 // pred_fallthru
      _
    %v55 = vld [vmem:[%s0] sm:$0xff]
    %v56 = vld [vmem:[%s0 + $0x8] sm:$0xff]
    %v57 = vld [vmem:[%s0 + $0x10] sm:$0xff]
    %v58 = vld [vmem:[%s0 + $0x18] sm:$0xff]
    %v59 = vpack.c.bf16 %v57, %v55
    %v60 = vpack.c.bf16 %v58, %v56
    %v61 = vld [vmem:[#allocation2] sm:$0xf]
    %v62 = vld [vmem:[#allocation2 + $0x4] sm:$0xf]
    %v63 = vld [vmem:[#allocation2 + $0x8] sm:$0xf]
    %v64 = vld [vmem:[#allocation2 + $0xc] sm:$0xf]
    %v65 = vld [vmem:[#allocation2 + $0x10] sm:$0xf]
    %v66 = vld [vmem:[#allocation2 + $0x14] sm:$0xf]
    %v67 = vld [vmem:[#allocation2 + $0x18] sm:$0xf]
    %v68 = vld [vmem:[#allocation2 + $0x1c] sm:$0xf]
    %v69 = vld [vmem:[#allocation2 + $0x20] sm:$0xf]
    %v70 = vld [vmem:[#allocation2 + $0x24] sm:$0xf]
    %v71 = vld [vmem:[#allocation2 + $0x28] sm:$0xf]
    %v72 = vld [vmem:[#allocation2 + $0x2c] sm:$0xf]
    %v73 = vld [vmem:[#allocation2 + $0x30] sm:$0xf]
    %v74 = vld [vmem:[#allocation2 + $0x34] sm:$0xf]
    %v75 = vld [vmem:[#allocation2 + $0x38] sm:$0xf]
    %v76 = vld [vmem:[#allocation2 + $0x3c] sm:$0xf]
    %v77 = vld [vmem:[#allocation2 + $0x40] sm:$0xf]
    %v78 = vld [vmem:[#allocation2 + $0x44] sm:$0xf]
    %v79 = vld [vmem:[#allocation2 + $0x48] sm:$0xf]
    %v80 = vld [vmem:[#allocation2 + $0x4c] sm:$0xf]
    %v81 = vld [vmem:[#allocation2 + $0x50] sm:$0xf]
    %v82 = vld [vmem:[#allocation2 + $0x54] sm:$0xf]
    %v83 = vld [vmem:[#allocation2 + $0x58] sm:$0xf]
    %v84 = vld [vmem:[#allocation2 + $0x5c] sm:$0xf]
    %v85 = vld [vmem:[#allocation2 + $0x60] sm:$0xf]
    %v86 = vld [vmem:[#allocation2 + $0x64] sm:$0xf]
    %v87 = vld [vmem:[#allocation2 + $0x68] sm:$0xf]
    %v88 = vld [vmem:[#allocation2 + $0x6c] sm:$0xf]
    %v89 = vld [vmem:[#allocation2 + $0x70] sm:$0xf]
    %v90 = vld [vmem:[#allocation2 + $0x74] sm:$0xf]
    %v91 = vld [vmem:[#allocation2 + $0x78] sm:$0xf]
    %v92 = vld [vmem:[#allocation2 + $0x7c] sm:$0xf]
    %v93 = vld [vmem:[%s2] sm:$0x1]
    %v95 = vlaneseq
    %v96 = vshrl.u32 %v95, 7
    %v97 = vsub.s32 0, %v96
    %v98 = vrot.slane %v93, %v97
    %v132 = vunpack.c.l.b16 %v61
    %v133 = vunpack.c.l.b16 %v62
    %v134 = vunpack.c.l.b16 %v63
    %v135 = vunpack.c.l.b16 %v64
    %v136 = vunpack.c.l.b16 %v65
    %v137 = vunpack.c.l.b16 %v66
    %v138 = vunpack.c.l.b16 %v67
    %v139 = vunpack.c.l.b16 %v68
    %v140 = vunpack.c.l.b16 %v69
    %v141 = vunpack.c.l.b16 %v70
    %v142 = vunpack.c.l.b16 %v71
    %v143 = vunpack.c.l.b16 %v72
    %v144 = vunpack.c.l.b16 %v73
    %v145 = vunpack.c.l.b16 %v74
    %v146 = vunpack.c.l.b16 %v75
    %v147 = vunpack.c.l.b16 %v76
    %v148 = vunpack.c.l.b16 %v77
    %v149 = vunpack.c.l.b16 %v78
    %v150 = vunpack.c.l.b16 %v79
    %v151 = vunpack.c.l.b16 %v80
    %v152 = vunpack.c.l.b16 %v81
    %v153 = vunpack.c.l.b16 %v82
    %v154 = vunpack.c.l.b16 %v83
    %v155 = vunpack.c.l.b16 %v84
    %v156 = vunpack.c.l.b16 %v85
    %v157 = vunpack.c.l.b16 %v86
    %v158 = vunpack.c.l.b16 %v87
    %v159 = vunpack.c.l.b16 %v88
    %v160 = vunpack.c.l.b16 %v89
    %v161 = vunpack.c.l.b16 %v90
    %v162 = vunpack.c.l.b16 %v91
    %v163 = vunpack.c.l.b16 %v92
    %v164 = vpack.c.b16 %v133, %v132
    %v165 = vpack.c.b16 %v135, %v134
    %v166 = vpack.c.b16 %v137, %v136
    %v167 = vpack.c.b16 %v139, %v138
    %v168 = vpack.c.b16 %v141, %v140
    %v169 = vpack.c.b16 %v143, %v142
    %v170 = vpack.c.b16 %v145, %v144
    %v171 = vpack.c.b16 %v147, %v146
    %v172 = vpack.c.b16 %v149, %v148
    %v173 = vpack.c.b16 %v151, %v150
    %v174 = vpack.c.b16 %v153, %v152
    %v175 = vpack.c.b16 %v155, %v154
    %v176 = vpack.c.b16 %v157, %v156
    %v177 = vpack.c.b16 %v159, %v158
    %v178 = vpack.c.b16 %v161, %v160
    %v179 = vpack.c.b16 %v163, %v162
    %196 = vmatprep.subr.bf16.mxu0 0
    %197 = vmatpush1.bf16.msra.mxu0 %v164
    %198 = vmatprep.subr.bf16.mxu0 0
    %199 = vmatpush1.bf16.msra.mxu0 %v165
    %200 = vmatprep.subr.bf16.mxu0 0
    %201 = vmatpush1.bf16.msra.mxu0 %v166
    %202 = vmatprep.subr.bf16.mxu0 0
    %203 = vmatpush1.bf16.msra.mxu0 %v167
    %204 = vmatprep.subr.bf16.mxu0 0
    %205 = vmatpush1.bf16.msra.mxu0 %v168
    %206 = vmatprep.subr.bf16.mxu0 0
    %207 = vmatpush1.bf16.msra.mxu0 %v169
    %208 = vmatprep.subr.bf16.mxu0 0
    %209 = vmatpush1.bf16.msra.mxu0 %v170
    %210 = vmatprep.subr.bf16.mxu0 0
    %211 = vmatpush1.bf16.msra.mxu0 %v171
    %212 = vmatprep.subr.bf16.mxu0 0
    %213 = vmatpush1.bf16.msra.mxu0 %v172
    %214 = vmatprep.subr.bf16.mxu0 0
    %215 = vmatpush1.bf16.msra.mxu0 %v173
    %216 = vmatprep.subr.bf16.mxu0 0
    %217 = vmatpush1.bf16.msra.mxu0 %v174
    %218 = vmatprep.subr.bf16.mxu0 0
    %219 = vmatpush1.bf16.msra.mxu0 %v175
    %220 = vmatprep.subr.bf16.mxu0 0
    %221 = vmatpush1.bf16.msra.mxu0 %v176
    %222 = vmatprep.subr.bf16.mxu0 0
    %223 = vmatpush1.bf16.msra.mxu0 %v177
    %224 = vmatprep.subr.bf16.mxu0 0
    %225 = vmatpush1.bf16.msra.mxu0 %v178
    %226 = vmatprep.subr.bf16.mxu0 0
    %227 = vmatpush1.bf16.msra.mxu0 %v179
    %228 = vmatprep.mubr.bf16.mxu0 %v60
    %229 = vmatmul.mubr.bf16.gmra.mrb[0].mxu0 %v59
    %v230 = vpop.f32.mrb[0].mxu0
    %v231 = vadd.f32 %v98, %v230
    %v232 = vpop.f32.mrb[0].mxu0
    %v233 = vpop.f32.mrb[0].mxu0
    %v234 = vadd.f32 %v98, %v233
    %v235 = vpop.f32.mrb[0].mxu0
    %236 = vdwg.mxu0
    %v237 = vmax.f32 %v231, 0.0
    %v238 = vmax.f32 %v234, 0.0
    %v239 = vpack.c.bf16 %v238, %v237
    %v240 = vld [vmem:[%s3] sm:$0xf]
    %v241 = vld [vmem:[%s3 + $0x4] sm:$0xf]
    %v242 = vld [vmem:[%s3 + $0x8] sm:$0xf]
    %v243 = vld [vmem:[%s3 + $0xc] sm:$0xf]
    %v244 = vld [vmem:[%s3 + $0x10] sm:$0xf]
    %v245 = vld [vmem:[%s3 + $0x14] sm:$0xf]
    %v246 = vld [vmem:[%s3 + $0x18] sm:$0xf]
    %v247 = vld [vmem:[%s3 + $0x1c] sm:$0xf]
    %v248 = vld [vmem:[%s3 + $0x20] sm:$0xf]
    %v249 = vld [vmem:[%s3 + $0x24] sm:$0xf]
    %v250 = vld [vmem:[%s3 + $0x28] sm:$0xf]
    %v251 = vld [vmem:[%s3 + $0x2c] sm:$0xf]
    %v252 = vld [vmem:[%s3 + $0x30] sm:$0xf]
    %v253 = vld [vmem:[%s3 + $0x34] sm:$0xf]
    %v254 = vld [vmem:[%s3 + $0x38] sm:$0xf]
    %v255 = vld [vmem:[%s3 + $0x3c] sm:$0xf]
    %v256 = vld [vmem:[%s4] sm:$0x1]
    %v258 = vlaneseq
    %v259 = vshrl.u32 %v258, 7
    %v260 = vsub.s32 0, %v259
    %v261 = vrot.slane %v256, %v260
    %v279 = vunpack.c.l.b16 %v240
    %v280 = vunpack.c.l.b16 %v241
    %v281 = vunpack.c.l.b16 %v242
    %v282 = vunpack.c.l.b16 %v243
    %v283 = vunpack.c.l.b16 %v244
    %v284 = vunpack.c.l.b16 %v245
    %v285 = vunpack.c.l.b16 %v246
    %v286 = vunpack.c.l.b16 %v247
    %v287 = vunpack.c.l.b16 %v248
    %v288 = vunpack.c.l.b16 %v249
    %v289 = vunpack.c.l.b16 %v250
    %v290 = vunpack.c.l.b16 %v251
    %v291 = vunpack.c.l.b16 %v252
    %v292 = vunpack.c.l.b16 %v253
    %v293 = vunpack.c.l.b16 %v254
    %v294 = vunpack.c.l.b16 %v255
    %v295 = vpack.c.b16 %v280, %v279
    %v296 = vpack.c.b16 %v282, %v281
    %v297 = vpack.c.b16 %v284, %v283
    %v298 = vpack.c.b16 %v286, %v285
    %v299 = vpack.c.b16 %v288, %v287
    %v300 = vpack.c.b16 %v290, %v289
    %v301 = vpack.c.b16 %v292, %v291
    %v302 = vpack.c.b16 %v294, %v293
    %311 = vmatprep.subr.bf16.mxu0 0
    %312 = vmatpush1.bf16.msra.mxu0 %v295
    %313 = vmatprep.subr.bf16.mxu0 0
    %314 = vmatpush1.bf16.msra.mxu0 %v296
    %315 = vmatprep.subr.bf16.mxu0 0
    %316 = vmatpush1.bf16.msra.mxu0 %v297
    %317 = vmatprep.subr.bf16.mxu0 0
    %318 = vmatpush1.bf16.msra.mxu0 %v298
    %319 = vmatprep.subr.bf16.mxu0 0
    %320 = vmatpush1.bf16.msra.mxu0 %v299
    %321 = vmatprep.subr.bf16.mxu0 0
    %322 = vmatpush1.bf16.msra.mxu0 %v300
    %323 = vmatprep.subr.bf16.mxu0 0
    %324 = vmatpush1.bf16.msra.mxu0 %v301
    %325 = vmatprep.subr.bf16.mxu0 0
    %326 = vmatpush1.bf16.msra.mxu0 %v302
    %327 = vmatprep.subr.bf16.mxu0 0
    %328 = vmatpush1.bf16.msra.mxu0 0
    %329 = vmatprep.subr.bf16.mxu0 0
    %330 = vmatpush1.bf16.msra.mxu0 0
    %331 = vmatprep.subr.bf16.mxu0 0
    %332 = vmatpush1.bf16.msra.mxu0 0
    %333 = vmatprep.subr.bf16.mxu0 0
    %334 = vmatpush1.bf16.msra.mxu0 0
    %335 = vmatprep.subr.bf16.mxu0 0
    %336 = vmatpush1.bf16.msra.mxu0 0
    %337 = vmatprep.subr.bf16.mxu0 0
    %338 = vmatpush1.bf16.msra.mxu0 0
    %339 = vmatprep.subr.bf16.mxu0 0
    %340 = vmatpush1.bf16.msra.mxu0 0
    %341 = vmatprep.subr.bf16.mxu0 0
    %342 = vmatpush1.bf16.msra.mxu0 0
    %343 = vmatprep.mubr.bf16.mxu0 0
    %344 = vmatmul.mubr.bf16.gmra.mrb[0].mxu0 %v239
    %v345 = vpop.f32.mrb[0].mxu0
    %v346 = vadd.f32 %v261, %v345
    %v347 = vpop.f32.mrb[0].mxu0
    %v348 = vpop.f32.mrb[0].mxu0
    %v349 = vadd.f32 %v261, %v348
    %v350 = vpop.f32.mrb[0].mxu0
    %351 = vdwg.mxu0
    %v352 = vmax.f32 %v346, 0.0
    %v353 = vmax.f32 %v349, 0.0
    %v354 = vpack.c.bf16 %v353, %v352
    %v355 = vld [vmem:[#allocation4] sm:$0xf]
    %v356 = vld [vmem:[#allocation4 + $0x4] sm:$0xf]
    %v357 = vld [vmem:[#allocation4 + $0x8] sm:$0xf]
    %v358 = vld [vmem:[#allocation4 + $0xc] sm:$0xf]
    %v359 = vld [vmem:[#allocation4 + $0x10] sm:$0xf]
    %v360 = vld [vmem:[#allocation4 + $0x14] sm:$0xf]
    %v361 = vld [vmem:[#allocation4 + $0x18] sm:$0xf]
    %v362 = vld [vmem:[#allocation4 + $0x1c] sm:$0xf]
    %v363 = vld [vmem:[#allocation4 + $0x20] sm:$0xf]
    %v364 = vld [vmem:[#allocation4 + $0x24] sm:$0xf]
    %v365 = vld [vmem:[#allocation4 + $0x28] sm:$0xf]
    %v366 = vld [vmem:[#allocation4 + $0x2c] sm:$0xf]
    %v367 = vld [vmem:[#allocation4 + $0x30] sm:$0xf]
    %v368 = vld [vmem:[#allocation4 + $0x34] sm:$0xf]
    %v369 = vld [vmem:[#allocation4 + $0x38] sm:$0xf]
    %v370 = vld [vmem:[#allocation4 + $0x3c] sm:$0xf]
    %v371 = vld [vmem:[%s6] sm:$0x1]
    %v373 = vlaneseq
    %v374 = vshrl.u32 %v373, 7
    %v375 = vsub.s32 0, %v374
    %v376 = vrot.slane %v371, %v375
    %v394 = vunpack.c.l.b16 %v355
    %v395 = vunpack.c.l.b16 %v356
    %v396 = vunpack.c.l.b16 %v357
    %v397 = vunpack.c.l.b16 %v358
    %v398 = vunpack.c.l.b16 %v359
    %v399 = vunpack.c.l.b16 %v360
    %v400 = vunpack.c.l.b16 %v361
    %v401 = vunpack.c.l.b16 %v362
    %v402 = vunpack.c.l.b16 %v363
    %v403 = vunpack.c.l.b16 %v364
    %v404 = vunpack.c.l.b16 %v365
    %v405 = vunpack.c.l.b16 %v366
    %v406 = vunpack.c.l.b16 %v367
    %v407 = vunpack.c.l.b16 %v368
    %v408 = vunpack.c.l.b16 %v369
    %v409 = vunpack.c.l.b16 %v370
    %v410 = vpack.c.b16 %v395, %v394
    %v411 = vpack.c.b16 %v397, %v396
    %v412 = vpack.c.b16 %v399, %v398
    %v413 = vpack.c.b16 %v401, %v400
    %v414 = vpack.c.b16 %v403, %v402
    %v415 = vpack.c.b16 %v405, %v404
    %v416 = vpack.c.b16 %v407, %v406
    %v417 = vpack.c.b16 %v409, %v408
    %426 = vmatprep.subr.bf16.mxu0 0
    %427 = vmatpush1.bf16.msra.mxu0 %v410
    %428 = vmatprep.subr.bf16.mxu0 0
    %429 = vmatpush1.bf16.msra.mxu0 %v411
    %430 = vmatprep.subr.bf16.mxu0 0
    %431 = vmatpush1.bf16.msra.mxu0 %v412
    %432 = vmatprep.subr.bf16.mxu0 0
    %433 = vmatpush1.bf16.msra.mxu0 %v413
    %434 = vmatprep.subr.bf16.mxu0 0
    %435 = vmatpush1.bf16.msra.mxu0 %v414
    %436 = vmatprep.subr.bf16.mxu0 0
    %437 = vmatpush1.bf16.msra.mxu0 %v415
    %438 = vmatprep.subr.bf16.mxu0 0
    %439 = vmatpush1.bf16.msra.mxu0 %v416
    %440 = vmatprep.subr.bf16.mxu0 0
    %441 = vmatpush1.bf16.msra.mxu0 %v417
    %442 = vmatprep.subr.bf16.mxu0 0
    %443 = vmatpush1.bf16.msra.mxu0 0
    %444 = vmatprep.subr.bf16.mxu0 0
    %445 = vmatpush1.bf16.msra.mxu0 0
    %446 = vmatprep.subr.bf16.mxu0 0
    %447 = vmatpush1.bf16.msra.mxu0 0
    %448 = vmatprep.subr.bf16.mxu0 0
    %449 = vmatpush1.bf16.msra.mxu0 0
    %450 = vmatprep.subr.bf16.mxu0 0
    %451 = vmatpush1.bf16.msra.mxu0 0
    %452 = vmatprep.subr.bf16.mxu0 0
    %453 = vmatpush1.bf16.msra.mxu0 0
    %454 = vmatprep.subr.bf16.mxu0 0
    %455 = vmatpush1.bf16.msra.mxu0 0
    %456 = vmatprep.subr.bf16.mxu0 0
    %457 = vmatpush1.bf16.msra.mxu0 0
    %458 = vmatprep.mubr.bf16.mxu0 0
    %459 = vmatmul.mubr.bf16.gmra.mrb[0].mxu0 %v354
    %v460 = vpop.f32.mrb[0].mxu0
    %v461 = vadd.f32 %v376, %v460
    %v462 = vpop.f32.mrb[0].mxu0
    %v463 = vpop.f32.mrb[0].mxu0
    %v464 = vadd.f32 %v376, %v463
    %v465 = vpop.f32.mrb[0].mxu0
    %466 = vdwg.mxu0
    %467 = vst [vmem:[%s7] sm:$0xff] %v461
    %468 = vst [vmem:[%s7 + $0x8] sm:$0xff] %v464
    // Predicated region
    $region38: #{_forward_jit.1} parent=1 // pred_check
      _
    $region39: #{_forward_jit.1} parent=1 // pred_check_branch
      %470 = sbr.rel (0) target = $region41
    $region40: #{_forward_jit.1} parent=1 // pred_region
      _
    $region41: #{_forward_jit.1} parent=1 // pred_fallthru
      _
    // Predicated region
    $region42: #{_forward_jit.1} parent=1 // pred_check
      _
    $region43: #{_forward_jit.1} parent=1 // pred_check_branch
      %472 = sbr.rel (0) target = $region45
    $region44: #{_forward_jit.1} parent=1 // pred_region
      _
    $region45: #{_forward_jit.1} parent=1 // pred_fallthru
      _
    %473 = vsyncpa [#allocation3], 1
    %474 = vsyncpa [#allocation5], 1

</llo_original>
